<compile_context>
chip_gen: v7x
topology: tpu7x:2x2x1
jax: 0.10.0
libtpu: 0.0.40
codegen_flags: <defaults>
</compile_context>

<pallas_src>
import functools

import jax
import jax.numpy as jnp
from jax.experimental import pallas as pl
from jax.experimental.pallas import tpu as pltpu


def _round_up(x, m):
    return ((x + m - 1) // m) * m


def _deberta_embeddings_kernel(*refs, eps, has_pos, has_type, has_mask, has_proj):
    """Fused: (word + pos + type) -> embed_proj -> LayerNorm -> mask."""
    o_ref = refs[-1]
    it = iter(refs[:-1])
    we_ref = next(it)
    pe_ref = next(it) if has_pos else None
    tte_ref = next(it) if has_type else None
    mask_ref = next(it) if has_mask else None
    proj_ref = next(it) if has_proj else None
    gamma_ref = next(it)
    beta_ref = next(it)

    # Sum the embedding streams in their native dtype (one VPU pass per add).
    emb = we_ref[...]
    if has_pos:
        emb = emb + pe_ref[...]
    if has_type:
        emb = emb + tte_ref[...]

    if has_proj:
        # MXU matmul: feed native (bf16/f32) operands straight in, f32 accumulate.
        h = jnp.dot(emb, proj_ref[...], preferred_element_type=jnp.float32)
    else:
        h = emb.astype(jnp.float32)

    # LayerNorm over the hidden (lane) dim in f32.
    mean = jnp.mean(h, axis=-1, keepdims=True)
    centered = h - mean
    var = jnp.mean(centered * centered, axis=-1, keepdims=True)
    out = centered * jax.lax.rsqrt(var + eps)
    out = out * gamma_ref[...] + beta_ref[...]      # gamma/beta already f32

    if has_mask:
        out = out * mask_ref[...]                   # (tm, 1) broadcasts over lanes

    # TODO(synk): training-mode StableDropout not implemented (eval-mode identity).
    o_ref[...] = out.astype(o_ref.dtype)


def deberta_v2_embeddings(input_ids, word_table, gamma, beta, *,
                          pos_table=None, type_table=None, proj_w=None,
                          token_type_ids=None, position_ids=None, mask=None,
                          eps=1e-7, tm=256):
    """DebertaV2Embeddings forward (eval mode).

    input_ids:   (B, S) int token ids
    word_table:  (vocab, E) word embedding table (pass bf16 for real sizes)
    pos_table:   (max_pos, E) or None (position_biased_input=False)
    type_table:  (type_vocab, E) or None (type_vocab_size == 0)
    proj_w:      (E, H) = nn.Linear(E, H, bias=False).weight.T, or None if E == H
    gamma, beta: (H,) LayerNorm parameters
    mask:        (B, S) attention mask or None
    tm:          row tile over flattened tokens (sweep 128/256/512)
    Returns (B, S, H).
    """
    B, S = input_ids.shape
    E = word_table.shape[-1]
    H = gamma.shape[-1]
    has_pos = pos_table is not None
    has_type = type_table is not None
    has_proj = proj_w is not None
    has_mask = mask is not None
    if not has_proj:
        assert E == H, "embed_proj required when embedding_size != hidden_size"

    if position_ids is None:
        position_ids = jnp.arange(S, dtype=jnp.int32)[None, :]
    if token_type_ids is None and has_type:
        token_type_ids = jnp.zeros((B, S), dtype=jnp.int32)

    # TODO(synk): embedding-table gathers done with jnp.take in the wrapper; an
    # in-kernel gather from HBM tables would need per-row manual DMA.
    we = jnp.take(word_table, input_ids, axis=0)                       # (B,S,E)
    dt = we.dtype

    M = B * S
    tm_eff = max(8, min(tm, _round_up(M, 8)))   # multiple of 8 (sublane aligned)
    Mp = _round_up(M, tm_eff)
    pad = Mp - M

    def _flat_pad(x):
        x = x.reshape(M, x.shape[-1])
        if pad:
            x = jnp.pad(x, ((0, pad), (0, 0)))
        return x

    row_spec = pl.BlockSpec((tm_eff, E), lambda i: (i, 0))
    const_spec_h = pl.BlockSpec((1, H), lambda i: (0, 0))

    args, in_specs = [], []
    args.append(_flat_pad(we)); in_specs.append(row_spec)
    if has_pos:
        pe = jnp.take(pos_table, position_ids.astype(jnp.int32), axis=0)
        pe = jnp.broadcast_to(pe, (B, S, E)).astype(dt)
        args.append(_flat_pad(pe)); in_specs.append(row_spec)
    if has_type:
        tte = jnp.take(type_table, token_type_ids.astype(jnp.int32), axis=0).astype(dt)
        args.append(_flat_pad(tte)); in_specs.append(row_spec)
    if has_mask:
        m2d = _flat_pad(mask.astype(jnp.float32).reshape(B, S, 1))
        args.append(m2d)
        in_specs.append(pl.BlockSpec((tm_eff, 1), lambda i: (i, 0)))
    if has_proj:
        # Keep caller dtype (bf16 recommended for real sizes) -> fed to MXU directly.
        args.append(proj_w)
        in_specs.append(pl.BlockSpec((E, H), lambda i: (0, 0)))
    args.append(gamma.astype(jnp.float32).reshape(1, H)); in_specs.append(const_spec_h)
    args.append(beta.astype(jnp.float32).reshape(1, H)); in_specs.append(const_spec_h)

    # Explicit VMEM budget (double-buffered tiles) with headroom.
    in_bytes = jnp.dtype(dt).itemsize
    est = 2 * tm_eff * _round_up(E, 128) * in_bytes * (1 + int(has_pos) + int(has_type))
    est += (2 * tm_eff * 128 * 4) if has_mask else 0
    est += 2 * tm_eff * _round_up(H, 128) * in_bytes                      # output tiles
    if has_proj:
        est += 2 * _round_up(E, 128) * _round_up(H, 128) * jnp.dtype(proj_w.dtype).itemsize
    est += 2 * 2 * 8 * _round_up(H, 128) * 4                              # gamma/beta
    vmem_limit = int(min(max(2 * est, 32 * 1024 * 1024), 100 * 1024 * 1024))

    kernel = functools.partial(_deberta_embeddings_kernel, eps=eps,
                               has_pos=has_pos, has_type=has_type,
                               has_mask=has_mask, has_proj=has_proj)

    out2d = pl.pallas_call(
        kernel,
        out_shape=jax.ShapeDtypeStruct((Mp, H), dt),
        grid_spec=pltpu.PrefetchScalarGridSpec(
            num_scalar_prefetch=0,
            grid=(Mp // tm_eff,),
            in_specs=in_specs,
            out_specs=pl.BlockSpec((tm_eff, H), lambda i: (i, 0)),
        ),
        compiler_params=pltpu.CompilerParams(
            dimension_semantics=("parallel",),
            vmem_limit_bytes=vmem_limit),
    )(*args)

    return out2d[:M].reshape(B, S, H)


def _reference(input_ids, word_table, pos_table, type_table, proj_w, gamma, beta,
               token_type_ids, mask, eps):
    B, S = input_ids.shape
    we = word_table[input_ids]
    pe = pos_table[jnp.arange(S)][None, :, :]
    tte = type_table[token_type_ids]
    emb = we + pe + tte
    emb = jnp.einsum("bse,eh->bsh", emb, proj_w)
    mean = emb.mean(-1, keepdims=True)
    var = ((emb - mean) ** 2).mean(-1, keepdims=True)
    out = (emb - mean) / jnp.sqrt(var + eps) * gamma + beta
    out = out * mask[..., None].astype(out.dtype)
    return out


if __name__ == "__main__":
    # Small config: batch=2, seq=100, embedding_size=64, hidden_size=128.
    # (H=128 keeps the output lane-dense; M=200 exercises the padding path and
    #  with tm=128 the grid has 2 steps, exercising the pipelined / megacore path.)
    B, S, E, H = 2, 100, 64, 128
    vocab, max_pos, type_vocab = 50, 128, 2
    eps = 1e-7

    key = jax.random.PRNGKey(0)
    ks = jax.random.split(key, 9)
    input_ids = jax.random.randint(ks[0], (B, S), 0, vocab)
    token_type_ids = jax.random.randint(ks[1], (B, S), 0, type_vocab)
    mask = (jax.random.uniform(ks[2], (B, S)) > 0.2).astype(jnp.float32)

    word_table = jax.random.normal(ks[3], (vocab, E), dtype=jnp.float32) * 0.02
    pos_table = jax.random.normal(ks[4], (max_pos, E), dtype=jnp.float32) * 0.02
    type_table = jax.random.normal(ks[5], (type_vocab, E), dtype=jnp.float32) * 0.02
    # nn.Linear(E, H, bias=False).weight is (H, E); stored transposed so the
    # kernel computes emb @ proj_w on the MXU.
    proj_w = jax.random.normal(ks[6], (E, H), dtype=jnp.float32) * 0.02
    gamma = 1.0 + 0.1 * jax.random.normal(ks[7], (H,), dtype=jnp.float32)
    beta = 0.1 * jax.random.normal(ks[8], (H,), dtype=jnp.float32)

    out = deberta_v2_embeddings(
        input_ids, word_table, gamma, beta,
        pos_table=pos_table, type_table=type_table, proj_w=proj_w,
        token_type_ids=token_type_ids, mask=mask, eps=eps, tm=128)
    out = jax.block_until_ready(out)

    ref = _reference(input_ids, word_table, pos_table, type_table, proj_w,
                     gamma, beta, token_type_ids, mask, eps)
    assert out.shape == (B, S, H)
    assert jnp.allclose(out, ref, atol=2e-3, rtol=2e-3), "mismatch vs reference"

    print("KERNEL_OK")
</pallas_src>

<mosaic_0001>
module attributes {stable_mosaic.version = 11 : i64} {
  func.func @_deberta_embeddings_kernel(%arg0: i32, %arg1: memref<128x64xf32, #tpu.memory_space<vmem>>, %arg2: memref<128x64xf32, #tpu.memory_space<vmem>>, %arg3: memref<128x64xf32, #tpu.memory_space<vmem>>, %arg4: memref<128x1xf32, #tpu.memory_space<vmem>>, %arg5: memref<64x128xf32, #tpu.memory_space<vmem>>, %arg6: memref<1x128xf32, #tpu.memory_space<vmem>>, %arg7: memref<1x128xf32, #tpu.memory_space<vmem>>, %arg8: memref<128x128xf32, #tpu.memory_space<vmem>>) attributes {dimension_semantics = [#tpu.dimension_semantics<parallel>], iteration_bounds = array<i64: 2>, scalar_prefetch = 0 : i64, scratch_operands = 0 : i64, tpu.core_type = #tpu.core_type<tc>, window_params = [{transform_indices = @transform_0, window_bounds = array<i64: 128, 64>}, {transform_indices = @transform_1, window_bounds = array<i64: 128, 64>}, {transform_indices = @transform_2, window_bounds = array<i64: 128, 64>}, {transform_indices = @transform_3, window_bounds = array<i64: 128, 1>}, {pipeline_mode = #tpu.pipeline_mode<synchronous>, transform_indices = @transform_4, window_bounds = array<i64: 64, 128>}, {pipeline_mode = #tpu.pipeline_mode<synchronous>, transform_indices = @transform_5, window_bounds = array<i64: 1, 128>}, {pipeline_mode = #tpu.pipeline_mode<synchronous>, transform_indices = @transform_6, window_bounds = array<i64: 1, 128>}, {transform_indices = @transform_7, window_bounds = array<i64: 128, 128>}]} {
    %c0 = arith.constant 0 : index
    %c0_0 = arith.constant 0 : index
    %0 = vector.load %arg1[%c0, %c0_0] : memref<128x64xf32, #tpu.memory_space<vmem>>, vector<128x64xf32>
    %c0_1 = arith.constant 0 : index
    %c0_2 = arith.constant 0 : index
    %1 = vector.load %arg2[%c0_1, %c0_2] : memref<128x64xf32, #tpu.memory_space<vmem>>, vector<128x64xf32>
    %2 = arith.addf %0, %1 : vector<128x64xf32>
    %c0_3 = arith.constant 0 : index
    %c0_4 = arith.constant 0 : index
    %3 = vector.load %arg3[%c0_3, %c0_4] : memref<128x64xf32, #tpu.memory_space<vmem>>, vector<128x64xf32>
    %4 = arith.addf %2, %3 : vector<128x64xf32>
    %c0_5 = arith.constant 0 : index
    %c0_6 = arith.constant 0 : index
    %5 = vector.load %arg5[%c0_5, %c0_6] : memref<64x128xf32, #tpu.memory_space<vmem>>, vector<64x128xf32>
    %cst = arith.constant dense<0.000000e+00> : vector<128x128xf32>
    %6 = tpu.matmul %4, %5, %cst {dimension_numbers = #tpu.dot_dimension_numbers<[1], [0], [0], [1], [0, 0, 1, 1], [], []>} : vector<128x64xf32>, vector<64x128xf32>, vector<128x128xf32> -> vector<128x128xf32>
    %cst_7 = arith.constant dense<0.000000e+00> : vector<128xf32>
    %7 = vector.multi_reduction <add>, %6, %cst_7 [1] : vector<128x128xf32> to vector<128xf32>
    %8 = vector.shape_cast %7 : vector<128xf32> to vector<128x1xf32>
    %cst_8 = arith.constant 1.280000e+02 : f32
    %9 = vector.broadcast %cst_8 : f32 to vector<128x1xf32>
    %10 = arith.divf %8, %9 : vector<128x1xf32>
    %11 = vector.broadcast %10 : vector<128x1xf32> to vector<128x128xf32>
    %12 = arith.subf %6, %11 : vector<128x128xf32>
    %13 = arith.mulf %12, %12 : vector<128x128xf32>
    %cst_9 = arith.constant dense<0.000000e+00> : vector<128xf32>
    %14 = vector.multi_reduction <add>, %13, %cst_9 [1] : vector<128x128xf32> to vector<128xf32>
    %15 = vector.shape_cast %14 : vector<128xf32> to vector<128x1xf32>
    %cst_10 = arith.constant 1.280000e+02 : f32
    %16 = vector.broadcast %cst_10 : f32 to vector<128x1xf32>
    %17 = arith.divf %15, %16 : vector<128x1xf32>
    %cst_11 = arith.constant 1.000000e-07 : f32
    %18 = vector.broadcast %cst_11 : f32 to vector<128x1xf32>
    %19 = arith.addf %17, %18 : vector<128x1xf32>
    %20 = math.rsqrt %19 : vector<128x1xf32>
    %21 = vector.broadcast %20 : vector<128x1xf32> to vector<128x128xf32>
    %22 = arith.mulf %12, %21 : vector<128x128xf32>
    %c0_12 = arith.constant 0 : index
    %c0_13 = arith.constant 0 : index
    %23 = vector.load %arg6[%c0_12, %c0_13] : memref<1x128xf32, #tpu.memory_space<vmem>>, vector<1x128xf32>
    %24 = vector.broadcast %23 : vector<1x128xf32> to vector<128x128xf32>
    %25 = arith.mulf %22, %24 : vector<128x128xf32>
    %c0_14 = arith.constant 0 : index
    %c0_15 = arith.constant 0 : index
    %26 = vector.load %arg7[%c0_14, %c0_15] : memref<1x128xf32, #tpu.memory_space<vmem>>, vector<1x128xf32>
    %27 = vector.broadcast %26 : vector<1x128xf32> to vector<128x128xf32>
    %28 = arith.addf %25, %27 : vector<128x128xf32>
    %c0_16 = arith.constant 0 : index
    %c0_17 = arith.constant 0 : index
    %29 = vector.load %arg4[%c0_16, %c0_17] : memref<128x1xf32, #tpu.memory_space<vmem>>, vector<128x1xf32>
    %30 = vector.broadcast %29 : vector<128x1xf32> to vector<128x128xf32>
    %31 = arith.mulf %28, %30 : vector<128x128xf32>
    %c0_18 = arith.constant 0 : index
    %c0_19 = arith.constant 0 : index
    %32 = vector.load %arg8[%c0_18, %c0_19] : memref<128x128xf32, #tpu.memory_space<vmem>>, vector<128x128xf32>
    tpu.vector_store %arg8[%c0_18, %c0_19], %31 {strides = array<i32>} : memref<128x128xf32, #tpu.memory_space<vmem>>, vector<128x128xf32>,
    return
  }
  func.func @transform_0(%arg0: i32) -> (i32, i32) {
    %c0_i32 = arith.constant 0 : i32
    %c0_i32_0 = arith.constant 0 : i32
    return %arg0, %c0_i32 : i32, i32
  }
  func.func @transform_1(%arg0: i32) -> (i32, i32) {
    %c0_i32 = arith.constant 0 : i32
    %c0_i32_0 = arith.constant 0 : i32
    return %arg0, %c0_i32 : i32, i32
  }
  func.func @transform_2(%arg0: i32) -> (i32, i32) {
    %c0_i32 = arith.constant 0 : i32
    %c0_i32_0 = arith.constant 0 : i32
    return %arg0, %c0_i32 : i32, i32
  }
  func.func @transform_3(%arg0: i32) -> (i32, i32) {
    %c0_i32 = arith.constant 0 : i32
    %c0_i32_0 = arith.constant 0 : i32
    return %arg0, %c0_i32 : i32, i32
  }
  func.func @transform_4(%arg0: i32) -> (i32, i32) {
    %c0_i32 = arith.constant 0 : i32
    %c0_i32_0 = arith.constant 0 : i32
    %c0_i32_1 = arith.constant 0 : i32
    return %c0_i32, %c0_i32_0 : i32, i32
  }
  func.func @transform_5(%arg0: i32) -> (i32, i32) {
    %c0_i32 = arith.constant 0 : i32
    %c0_i32_0 = arith.constant 0 : i32
    %c0_i32_1 = arith.constant 0 : i32
    return %c0_i32, %c0_i32_0 : i32, i32
  }
  func.func @transform_6(%arg0: i32) -> (i32, i32) {
    %c0_i32 = arith.constant 0 : i32
    %c0_i32_0 = arith.constant 0 : i32
    %c0_i32_1 = arith.constant 0 : i32
    return %c0_i32, %c0_i32_0 : i32, i32
  }
  func.func @transform_7(%arg0: i32) -> (i32, i32) {
    %c0_i32 = arith.constant 0 : i32
    %c0_i32_0 = arith.constant 0 : i32
    return %arg0, %c0_i32 : i32, i32
  }
}

</mosaic_0001>

<llo_original>
// kernel: tpu_custom_call.1
$region0: #{tpu_custom_call.1}
  #allocation0 [shape = 'u32[]', space=smem, size = 0x4, offset = 0x4, fixed_abs, tag = 'smem constant byte address 0x4 - core index']
  #allocation1 [shape = 'u32[144,128]{1,0:T(1,128)}', space=vmem, size = 0x12000, scoped, tag = 'internal scratch']
  %s0 = inlined_call_operand.vmem [shape: f32[256,64], index: 0, kind: input, shape index: {}]
  %s1 = inlined_call_operand.vmem [shape: f32[256,64], index: 1, kind: input, shape index: {}]
  %s2 = inlined_call_operand.vmem [shape: f32[256,64], index: 2, kind: input, shape index: {}]
  %s3 = inlined_call_operand.vmem [shape: f32[256,1], index: 3, kind: input, shape index: {}]
  %s4 = inlined_call_operand.vmem [shape: f32[64,128], index: 4, kind: input, shape index: {}]
  %s5 = inlined_call_operand.vmem [shape: f32[1,128], index: 5, kind: input, shape index: {}]
  %s6 = inlined_call_operand.vmem [shape: f32[1,128], index: 6, kind: input, shape index: {}]
  %s7 = inlined_call_operand.hbm [shape: f32[256,128], index: 7, kind: output, shape index: {}]
  %s8 = sld [smem:[#allocation0]]
  $region61: #{tpu_custom_call.1} parent=0
    _
  %s10 = ssub.s32 1, %s8
  %s11 = scalar_select 0, %s10, %s8
  $region1: #{tpu_custom_call.1} parent=0
    #allocation2 [shape = 'u8[131072]{0}', space=vmem, size = 0x20000, scoped, tag = 'output window, operand 0']
    #allocation3 [shape = 's32[2]{0}', space=sflag, size = 0x8, scoped, tag = 'scoped memory for tpu_custom_call.1']
    %12 = vsyncpa [#allocation3], 0
    %s13 = scalar_lea.sflag [#allocation3], 1
    %14 = vsyncpa %s13, 0
    loop: start=0, step=1, limit=4
    $region2: #{tpu_custom_call.1} parent=1 // loop_pre_header
      _
    $region3: #{tpu_custom_call.1} parent=1 // loop_header
      %s16 = sphi 0, %s20
      %p17 = scmp.ge.s32.totalorder %s16, 4
      %s26 = sphi 0, %s28
      %s29 = sphi 0, %s26
      %s30 = sphi 0, %s29
      %s46 = sphi 0, %s30
      %s52 = sphi 0, %s54
      %s55 = sphi 0, %s52
      %s56 = sphi 0, %s55
      %s72 = sphi 0, %s56
      %s78 = sphi 0, %s80
      %s81 = sphi 0, %s78
      %s82 = sphi 0, %s81
      %s98 = sphi 0, %s82
      %s104 = sphi 0, %s106
      %s107 = sphi 0, %s104
      %s108 = sphi 0, %s107
      %s124 = sphi 0, %s108
      %s128 = sphi 0, %s128
      %s130 = sphi 0, %s128
      %s131 = sphi 0, %s130
      %s145 = sphi 0, %s131
      %s149 = sphi 0, %s149
      %s151 = sphi 0, %s149
      %s152 = sphi 0, %s151
      %s166 = sphi 0, %s152
      %s170 = sphi 0, %s170
      %s172 = sphi 0, %s170
      %s173 = sphi 0, %s172
      %s187 = sphi 0, %s173
      %s193 = sphi 0, %s195
      %s196 = sphi 0, %s193
      %s197 = sphi 0, %s196
      %s213 = sphi 0, %s197
    $region4: #{tpu_custom_call.1} parent=1 // loop_header_branch
      %19 = sbr.rel (%p17) target = $region8
    $region5: #{tpu_custom_call.1} parent=1 // loop_body
      %s21 = ssub.s32 %s16, 1
      %s22 = ssub.s32 %s16, 2
      %s23 = sadd.s32 %s16, 1
      %s24 = ssub.s32 %s16, %s23
      %p25 = scmp.eq.s32.totalorder %s24, 0
      %s27 = sadd.s32 %s26, 1
      %s28 = scalar_select %p25, %s26, %s27
      %p31 = pneg %p25
      %p32 = scmp.eq.s32.totalorder %s16, 1
      %p33 = por %p31, %p32
      %p34 = scmp.ne.s32.totalorder %s26, %s29
      %p35 = scmp.eq.s32.totalorder %s16, 0
      %p36 = por %p34, %p35
      %p37 = scmp.ne.s32.totalorder %s26, %s29
      %p38 = scmp.eq.s32.totalorder %s21, 1
      %p39 = por %p37, %p38
      %p40 = scmp.ne.s32.totalorder %s29, %s30
      %p41 = scmp.eq.s32.totalorder %s21, 0
      %p42 = por %p40, %p41
      %p43 = scmp.ne.s32.totalorder %s29, %s30
      %p44 = scmp.eq.s32.totalorder %s22, 1
      %p45 = por %p43, %p44
      %p47 = scmp.ne.s32.totalorder %s30, %s46
      %p48 = scmp.eq.s32.totalorder %s22, 0
      %p49 = por %p47, %p48
      %s50 = ssub.s32 %s16, %s23
      %p51 = scmp.eq.s32.totalorder %s50, 0
      %s53 = sadd.s32 %s52, 1
      %s54 = scalar_select %p51, %s52, %s53
      %p57 = pneg %p51
      %p58 = scmp.eq.s32.totalorder %s16, 1
      %p59 = por %p57, %p58
      %p60 = scmp.ne.s32.totalorder %s52, %s55
      %p61 = scmp.eq.s32.totalorder %s16, 0
      %p62 = por %p60, %p61
      %p63 = scmp.ne.s32.totalorder %s52, %s55
      %p64 = scmp.eq.s32.totalorder %s21, 1
      %p65 = por %p63, %p64
      %p66 = scmp.ne.s32.totalorder %s55, %s56
      %p67 = scmp.eq.s32.totalorder %s21, 0
      %p68 = por %p66, %p67
      %p69 = scmp.ne.s32.totalorder %s55, %s56
      %p70 = scmp.eq.s32.totalorder %s22, 1
      %p71 = por %p69, %p70
      %p73 = scmp.ne.s32.totalorder %s56, %s72
      %p74 = scmp.eq.s32.totalorder %s22, 0
      %p75 = por %p73, %p74
      %s76 = ssub.s32 %s16, %s23
      %p77 = scmp.eq.s32.totalorder %s76, 0
      %s79 = sadd.s32 %s78, 1
      %s80 = scalar_select %p77, %s78, %s79
      %p83 = pneg %p77
      %p84 = scmp.eq.s32.totalorder %s16, 1
      %p85 = por %p83, %p84
      %p86 = scmp.ne.s32.totalorder %s78, %s81
      %p87 = scmp.eq.s32.totalorder %s16, 0
      %p88 = por %p86, %p87
      %p89 = scmp.ne.s32.totalorder %s78, %s81
      %p90 = scmp.eq.s32.totalorder %s21, 1
      %p91 = por %p89, %p90
      %p92 = scmp.ne.s32.totalorder %s81, %s82
      %p93 = scmp.eq.s32.totalorder %s21, 0
      %p94 = por %p92, %p93
      %p95 = scmp.ne.s32.totalorder %s81, %s82
      %p96 = scmp.eq.s32.totalorder %s22, 1
      %p97 = por %p95, %p96
      %p99 = scmp.ne.s32.totalorder %s82, %s98
      %p100 = scmp.eq.s32.totalorder %s22, 0
      %p101 = por %p99, %p100
      %s102 = ssub.s32 %s16, %s23
      %p103 = scmp.eq.s32.totalorder %s102, 0
      %s105 = sadd.s32 %s104, 1
      %s106 = scalar_select %p103, %s104, %s105
      %p109 = pneg %p103
      %p110 = scmp.eq.s32.totalorder %s16, 1
      %p111 = por %p109, %p110
      %p112 = scmp.ne.s32.totalorder %s104, %s107
      %p113 = scmp.eq.s32.totalorder %s16, 0
      %p114 = por %p112, %p113
      %p115 = scmp.ne.s32.totalorder %s104, %s107
      %p116 = scmp.eq.s32.totalorder %s21, 1
      %p117 = por %p115, %p116
      %p118 = scmp.ne.s32.totalorder %s107, %s108
      %p119 = scmp.eq.s32.totalorder %s21, 0
      %p120 = por %p118, %p119
      %p121 = scmp.ne.s32.totalorder %s107, %s108
      %p122 = scmp.eq.s32.totalorder %s22, 1
      %p123 = por %p121, %p122
      %p125 = scmp.ne.s32.totalorder %s108, %s124
      %p126 = scmp.eq.s32.totalorder %s22, 0
      %p127 = por %p125, %p126
      %s129 = sadd.s32 %s128, 1
      %p132 = scmp.eq.s32.totalorder %s16, 1
      %p133 = scmp.ne.s32.totalorder %s128, %s130
      %p134 = scmp.eq.s32.totalorder %s16, 0
      %p135 = por %p133, %p134
      %p136 = scmp.ne.s32.totalorder %s128, %s130
      %p137 = scmp.eq.s32.totalorder %s21, 1
      %p138 = por %p136, %p137
      %p139 = scmp.ne.s32.totalorder %s130, %s131
      %p140 = scmp.eq.s32.totalorder %s21, 0
      %p141 = por %p139, %p140
      %p142 = scmp.ne.s32.totalorder %s130, %s131
      %p143 = scmp.eq.s32.totalorder %s22, 1
      %p144 = por %p142, %p143
      %p146 = scmp.ne.s32.totalorder %s131, %s145
      %p147 = scmp.eq.s32.totalorder %s22, 0
      %p148 = por %p146, %p147
      %s150 = sadd.s32 %s149, 1
      %p153 = scmp.eq.s32.totalorder %s16, 1
      %p154 = scmp.ne.s32.totalorder %s149, %s151
      %p155 = scmp.eq.s32.totalorder %s16, 0
      %p156 = por %p154, %p155
      %p157 = scmp.ne.s32.totalorder %s149, %s151
      %p158 = scmp.eq.s32.totalorder %s21, 1
      %p159 = por %p157, %p158
      %p160 = scmp.ne.s32.totalorder %s151, %s152
      %p161 = scmp.eq.s32.totalorder %s21, 0
      %p162 = por %p160, %p161
      %p163 = scmp.ne.s32.totalorder %s151, %s152
      %p164 = scmp.eq.s32.totalorder %s22, 1
      %p165 = por %p163, %p164
      %p167 = scmp.ne.s32.totalorder %s152, %s166
      %p168 = scmp.eq.s32.totalorder %s22, 0
      %p169 = por %p167, %p168
      %s171 = sadd.s32 %s170, 1
      %p174 = scmp.eq.s32.totalorder %s16, 1
      %p175 = scmp.ne.s32.totalorder %s170, %s172
      %p176 = scmp.eq.s32.totalorder %s16, 0
      %p177 = por %p175, %p176
      %p178 = scmp.ne.s32.totalorder %s170, %s172
      %p179 = scmp.eq.s32.totalorder %s21, 1
      %p180 = por %p178, %p179
      %p181 = scmp.ne.s32.totalorder %s172, %s173
      %p182 = scmp.eq.s32.totalorder %s21, 0
      %p183 = por %p181, %p182
      %p184 = scmp.ne.s32.totalorder %s172, %s173
      %p185 = scmp.eq.s32.totalorder %s22, 1
      %p186 = por %p184, %p185
      %p188 = scmp.ne.s32.totalorder %s173, %s187
      %p189 = scmp.eq.s32.totalorder %s22, 0
      %p190 = por %p188, %p189
      %s191 = ssub.s32 %s16, %s23
      %p192 = scmp.eq.s32.totalorder %s191, 0
      %s194 = sadd.s32 %s193, 1
      %s195 = scalar_select %p192, %s193, %s194
      %p198 = pneg %p192
      %p199 = scmp.eq.s32.totalorder %s16, 1
      %p200 = por %p198, %p199
      %p201 = scmp.ne.s32.totalorder %s193, %s196
      %p202 = scmp.eq.s32.totalorder %s16, 0
      %p203 = por %p201, %p202
      %p204 = scmp.ne.s32.totalorder %s193, %s196
      %p205 = scmp.eq.s32.totalorder %s21, 1
      %p206 = por %p204, %p205
      %p207 = scmp.ne.s32.totalorder %s196, %s197
      %p208 = scmp.eq.s32.totalorder %s21, 0
      %p209 = por %p207, %p208
      %p210 = scmp.ne.s32.totalorder %s196, %s197
      %p211 = scmp.eq.s32.totalorder %s22, 1
      %p212 = por %p210, %p211
      %p214 = scmp.ne.s32.totalorder %s197, %s213
      %p215 = scmp.eq.s32.totalorder %s22, 0
      %p216 = por %p214, %p215
      %p217 = scmp.le.s32.totalorder 1, %s16
      %p218 = scmp.lt.s32.totalorder %s16, 3
      %p219 = pnand %p217, %p218
      %p220 = pneg %p219
      // Predicated region
      $region9: #{tpu_custom_call.1} parent=5 // pred_check
        _
      $region10: #{tpu_custom_call.1} parent=5 // pred_check_branch
        %222 = sbr.rel (%p219) target = $region12
      $region11: #{tpu_custom_call.1} parent=5 // pred_region
        %s223 = ssub.s32 %s16, 1
        // Predicated region
        $region13: #{tpu_custom_call.1} parent=11 // pred_check
          %p224 = pneg %p141
        $region14: #{tpu_custom_call.1} parent=11 // pred_check_branch
          %226 = sbr.rel (%p224) target = $region16
        $region15: #{tpu_custom_call.1} parent=11 // pred_region
          _
        $region16: #{tpu_custom_call.1} parent=11 // pred_fallthru
          _
        // Predicated region
        $region17: #{tpu_custom_call.1} parent=11 // pred_check
          %p227 = pneg %p162
        $region18: #{tpu_custom_call.1} parent=11 // pred_check_branch
          %229 = sbr.rel (%p227) target = $region20
        $region19: #{tpu_custom_call.1} parent=11 // pred_region
          _
        $region20: #{tpu_custom_call.1} parent=11 // pred_fallthru
          _
        // Predicated region
        $region21: #{tpu_custom_call.1} parent=11 // pred_check
          %p230 = pneg %p183
        $region22: #{tpu_custom_call.1} parent=11 // pred_check_branch
          %232 = sbr.rel (%p230) target = $region24
        $region23: #{tpu_custom_call.1} parent=11 // pred_region
          _
        $region24: #{tpu_custom_call.1} parent=11 // pred_fallthru
          _
      $region12: #{tpu_custom_call.1} parent=5 // pred_fallthru
        _
      %p233 = scmp.lt.s32.totalorder %s16, 2
      // Predicated region
      $region25: #{tpu_custom_call.1} parent=5 // pred_check
        %p234 = pneg %p233
      $region26: #{tpu_custom_call.1} parent=5 // pred_check_branch
        %236 = sbr.rel (%p234) target = $region28
      $region27: #{tpu_custom_call.1} parent=5 // pred_region
        // Predicated region
        $region29: #{tpu_custom_call.1} parent=27 // pred_check
          %p237 = pneg %p36
        $region30: #{tpu_custom_call.1} parent=27 // pred_check_branch
          %239 = sbr.rel (%p237) target = $region32
        $region31: #{tpu_custom_call.1} parent=27 // pred_region
          %s240 = smul.u32 16, %s16
          %p241 = scmp.lt.s32.totalorder %s240, 31
          %s242 = scalar_select %p241, %s240, 31
          %s243 = smul.addr %s242, 8
          %s244 = scalar_lea.vmem %s0, %s243
          %s245 = smul.u32 16, %s16
        $region32: #{tpu_custom_call.1} parent=27 // pred_fallthru
          _
        // Predicated region
        $region33: #{tpu_custom_call.1} parent=27 // pred_check
          %p246 = pneg %p62
        $region34: #{tpu_custom_call.1} parent=27 // pred_check_branch
          %248 = sbr.rel (%p246) target = $region36
        $region35: #{tpu_custom_call.1} parent=27 // pred_region
          %s249 = smul.u32 16, %s16
          %p250 = scmp.lt.s32.totalorder %s249, 31
          %s251 = scalar_select %p250, %s249, 31
          %s252 = smul.addr %s251, 8
          %s253 = scalar_lea.vmem %s1, %s252
          %s254 = smul.u32 16, %s16
        $region36: #{tpu_custom_call.1} parent=27 // pred_fallthru
          _
        // Predicated region
        $region37: #{tpu_custom_call.1} parent=27 // pred_check
          %p255 = pneg %p88
        $region38: #{tpu_custom_call.1} parent=27 // pred_check_branch
          %257 = sbr.rel (%p255) target = $region40
        $region39: #{tpu_custom_call.1} parent=27 // pred_region
          %s258 = smul.u32 16, %s16
          %p259 = scmp.lt.s32.totalorder %s258, 31
          %s260 = scalar_select %p259, %s258, 31
          %s261 = smul.addr %s260, 8
          %s262 = scalar_lea.vmem %s2, %s261
          %s263 = smul.u32 16, %s16
        $region40: #{tpu_custom_call.1} parent=27 // pred_fallthru
          _
        // Predicated region
        $region41: #{tpu_custom_call.1} parent=27 // pred_check
          %p264 = pneg %p114
        $region42: #{tpu_custom_call.1} parent=27 // pred_check_branch
          %266 = sbr.rel (%p264) target = $region44
        $region43: #{tpu_custom_call.1} parent=27 // pred_region
          %s267 = smul.u32 16, %s16
          %p268 = scmp.lt.s32.totalorder %s267, 31
          %s269 = scalar_select %p268, %s267, 31
          %s270 = smul.addr %s269, 8
          %s271 = scalar_lea.vmem %s3, %s270
          %s272 = smul.u32 16, %s16
        $region44: #{tpu_custom_call.1} parent=27 // pred_fallthru
          _
      $region28: #{tpu_custom_call.1} parent=5 // pred_fallthru
        _
      %p273 = scmp.le.s32.totalorder 1, %s16
      %p274 = scmp.lt.s32.totalorder %s16, 3
      %p275 = pnand %p273, %p274
      %p276 = pneg %p275
      // Predicated region
      $region45: #{tpu_custom_call.1} parent=5 // pred_check
        _
      $region46: #{tpu_custom_call.1} parent=5 // pred_check_branch
        %278 = sbr.rel (%p275) target = $region48
      $region47: #{tpu_custom_call.1} parent=5 // pred_region
        %s279 = ssub.s32 %s16, 1
        %s280 = smul.u32 16, %s21
        %p281 = scmp.lt.s32.totalorder %s280, 31
        %s282 = scalar_select %p281, %s280, 31
        %s283 = smul.addr %s282, 8
        %s284 = scalar_lea.vmem %s0, %s283
        %p285 = pneg %p42
        %p286 = pneg %p39
        %s287 = smul.u32 16, %s21
        %p288 = scmp.lt.s32.totalorder %s287, 31
        %s289 = scalar_select %p288, %s287, 31
        %s290 = smul.addr %s289, 8
        %s291 = scalar_lea.vmem %s1, %s290
        %p292 = pneg %p68
        %p293 = pneg %p65
        %s294 = smul.u32 16, %s21
        %p295 = scmp.lt.s32.totalorder %s294, 31
        %s296 = scalar_select %p295, %s294, 31
        %s297 = smul.addr %s296, 8
        %s298 = scalar_lea.vmem %s2, %s297
        %p299 = pneg %p94
        %p300 = pneg %p91
        %s301 = smul.u32 16, %s21
        %p302 = scmp.lt.s32.totalorder %s301, 31
        %s303 = scalar_select %p302, %s301, 31
        %s304 = smul.addr %s303, 8
        %s305 = scalar_lea.vmem %s3, %s304
        %p306 = pneg %p120
        %p307 = pneg %p117
        %p308 = pneg %p141
        %p309 = pneg %p138
        %p310 = pneg %p162
        %p311 = pneg %p159
        %p312 = pneg %p183
        %p313 = pneg %p180
        %p314 = pneg %p209
        %p315 = pneg %p206
        %s316 = sand.u32 %s196, 1
        %s317 = scalar_lea.sflag [#allocation3], %s316
        %s318 = sand.u32 %s196, 1
        %s319 = smul.addr %s318, 128
        %s320 = scalar_lea.vmem [#allocation2], %s319
        %s321 = smul.u32 16, %s21
        %p322 = scmp.lt.s32.totalorder %s321, 31
        %s323 = scalar_select %p322, %s321, 31
        %s324 = smul.addr %s323, 8
        %s325 = scalar_lea.vmem %s0, %s324
        %s326 = smul.u32 16, %s21
        %s327 = smul.u32 16, %s21
        %p328 = scmp.lt.s32.totalorder %s327, 31
        %s329 = scalar_select %p328, %s327, 31
        %s330 = smul.addr %s329, 8
        %s331 = scalar_lea.vmem %s1, %s330
        %s332 = smul.u32 16, %s21
        %s333 = smul.u32 16, %s21
        %p334 = scmp.lt.s32.totalorder %s333, 31
        %s335 = scalar_select %p334, %s333, 31
        %s336 = smul.addr %s335, 8
        %s337 = scalar_lea.vmem %s2, %s336
        %s338 = smul.u32 16, %s21
        %s339 = smul.u32 16, %s21
        %p340 = scmp.lt.s32.totalorder %s339, 31
        %s341 = scalar_select %p340, %s339, 31
        %s342 = smul.addr %s341, 8
        %s343 = scalar_lea.vmem %s3, %s342
        %s344 = smul.u32 16, %s21
        %s345 = smul.u32 16, %s21
        %v346 = vld [vmem:[%s325] sm:$0xff]
        %v347 = vld [vmem:[%s325 + $0x8] sm:$0xff]
        %v348 = vld [vmem:[%s325 + $0x10] sm:$0xff]
        %v349 = vld [vmem:[%s325 + $0x18] sm:$0xff]
        %v350 = vld [vmem:[%s325 + $0x20] sm:$0xff]
        %v351 = vld [vmem:[%s325 + $0x28] sm:$0xff]
        %v352 = vld [vmem:[%s325 + $0x30] sm:$0xff]
        %v353 = vld [vmem:[%s325 + $0x38] sm:$0xff]
        %v354 = vld [vmem:[%s325 + $0x40] sm:$0xff]
        %v355 = vld [vmem:[%s325 + $0x48] sm:$0xff]
        %v356 = vld [vmem:[%s325 + $0x50] sm:$0xff]
        %v357 = vld [vmem:[%s325 + $0x58] sm:$0xff]
        %v358 = vld [vmem:[%s325 + $0x60] sm:$0xff]
        %v359 = vld [vmem:[%s325 + $0x68] sm:$0xff]
        %v360 = vld [vmem:[%s325 + $0x70] sm:$0xff]
        %v361 = vld [vmem:[%s325 + $0x78] sm:$0xff]
        %v362 = vld [vmem:[%s331] sm:$0xff]
        %v363 = vld [vmem:[%s331 + $0x8] sm:$0xff]
        %v364 = vld [vmem:[%s331 + $0x10] sm:$0xff]
        %v365 = vld [vmem:[%s331 + $0x18] sm:$0xff]
        %v366 = vld [vmem:[%s331 + $0x20] sm:$0xff]
        %v367 = vld [vmem:[%s331 + $0x28] sm:$0xff]
        %v368 = vld [vmem:[%s331 + $0x30] sm:$0xff]
        %v369 = vld [vmem:[%s331 + $0x38] sm:$0xff]
        %v370 = vld [vmem:[%s331 + $0x40] sm:$0xff]
        %v371 = vld [vmem:[%s331 + $0x48] sm:$0xff]
        %v372 = vld [vmem:[%s331 + $0x50] sm:$0xff]
        %v373 = vld [vmem:[%s331 + $0x58] sm:$0xff]
        %v374 = vld [vmem:[%s331 + $0x60] sm:$0xff]
        %v375 = vld [vmem:[%s331 + $0x68] sm:$0xff]
        %v376 = vld [vmem:[%s331 + $0x70] sm:$0xff]
        %v377 = vld [vmem:[%s331 + $0x78] sm:$0xff]
        %v378 = vadd.f32 %v346, %v362
        %v379 = vadd.f32 %v347, %v363
        %v380 = vadd.f32 %v348, %v364
        %v381 = vadd.f32 %v349, %v365
        %v382 = vadd.f32 %v350, %v366
        %v383 = vadd.f32 %v351, %v367
        %v384 = vadd.f32 %v352, %v368
        %v385 = vadd.f32 %v353, %v369
        %v386 = vadd.f32 %v354, %v370
        %v387 = vadd.f32 %v355, %v371
        %v388 = vadd.f32 %v356, %v372
        %v389 = vadd.f32 %v357, %v373
        %v390 = vadd.f32 %v358, %v374
        %v391 = vadd.f32 %v359, %v375
        %v392 = vadd.f32 %v360, %v376
        %v393 = vadd.f32 %v361, %v377
        %v394 = vld [vmem:[%s337] sm:$0xff]
        %v395 = vld [vmem:[%s337 + $0x8] sm:$0xff]
        %v396 = vld [vmem:[%s337 + $0x10] sm:$0xff]
        %v397 = vld [vmem:[%s337 + $0x18] sm:$0xff]
        %v398 = vld [vmem:[%s337 + $0x20] sm:$0xff]
        %v399 = vld [vmem:[%s337 + $0x28] sm:$0xff]
        %v400 = vld [vmem:[%s337 + $0x30] sm:$0xff]
        %v401 = vld [vmem:[%s337 + $0x38] sm:$0xff]
        %v402 = vld [vmem:[%s337 + $0x40] sm:$0xff]
        %v403 = vld [vmem:[%s337 + $0x48] sm:$0xff]
        %v404 = vld [vmem:[%s337 + $0x50] sm:$0xff]
        %v405 = vld [vmem:[%s337 + $0x58] sm:$0xff]
        %v406 = vld [vmem:[%s337 + $0x60] sm:$0xff]
        %v407 = vld [vmem:[%s337 + $0x68] sm:$0xff]
        %v408 = vld [vmem:[%s337 + $0x70] sm:$0xff]
        %v409 = vld [vmem:[%s337 + $0x78] sm:$0xff]
        %v410 = vadd.f32 %v378, %v394
        %v411 = vadd.f32 %v379, %v395
        %v412 = vadd.f32 %v380, %v396
        %v413 = vadd.f32 %v381, %v397
        %v414 = vadd.f32 %v382, %v398
        %v415 = vadd.f32 %v383, %v399
        %v416 = vadd.f32 %v384, %v400
        %v417 = vadd.f32 %v385, %v401
        %v418 = vadd.f32 %v386, %v402
        %v419 = vadd.f32 %v387, %v403
        %v420 = vadd.f32 %v388, %v404
        %v421 = vadd.f32 %v389, %v405
        %v422 = vadd.f32 %v390, %v406
        %v423 = vadd.f32 %v391, %v407
        %v424 = vadd.f32 %v392, %v408
        %v425 = vadd.f32 %v393, %v409
        %v426 = vld [vmem:[%s4] sm:$0xff]
        %v427 = vld [vmem:[%s4 + $0x8] sm:$0xff]
        %v428 = vld [vmem:[%s4 + $0x10] sm:$0xff]
        %v429 = vld [vmem:[%s4 + $0x18] sm:$0xff]
        %v430 = vld [vmem:[%s4 + $0x20] sm:$0xff]
        %v431 = vld [vmem:[%s4 + $0x28] sm:$0xff]
        %v432 = vld [vmem:[%s4 + $0x30] sm:$0xff]
        %v433 = vld [vmem:[%s4 + $0x38] sm:$0xff]
        %vm434 = vcmask 523264
        %v436 = vsel %vm434, %v410, 0
        %v439 = vsel %vm434, %v411, 0
        %v442 = vsel %vm434, %v412, 0
        %v445 = vsel %vm434, %v413, 0
        %v448 = vsel %vm434, %v414, 0
        %v451 = vsel %vm434, %v415, 0
        %v454 = vsel %vm434, %v416, 0
        %v457 = vsel %vm434, %v417, 0
        %v460 = vsel %vm434, %v418, 0
        %v463 = vsel %vm434, %v419, 0
        %v466 = vsel %vm434, %v420, 0
        %v469 = vsel %vm434, %v421, 0
        %v472 = vsel %vm434, %v422, 0
        %v475 = vsel %vm434, %v423, 0
        %v478 = vsel %vm434, %v424, 0
        %v481 = vsel %vm434, %v425, 0
        %483 = vmatprep.subr.mxu0 0.0
        %484 = vmatpush1.msra.mxu0 %v426
        %485 = vmatprep.subr.mxu0 0.0
        %486 = vmatpush1.msra.mxu0 %v427
        %487 = vmatprep.subr.mxu0 0.0
        %488 = vmatpush1.msra.mxu0 %v428
        %489 = vmatprep.subr.mxu0 0.0
        %490 = vmatpush1.msra.mxu0 %v429
        %491 = vmatprep.subr.mxu0 0.0
        %492 = vmatpush1.msra.mxu0 %v430
        %493 = vmatprep.subr.mxu0 0.0
        %494 = vmatpush1.msra.mxu0 %v431
        %495 = vmatprep.subr.mxu0 0.0
        %496 = vmatpush1.msra.mxu0 %v432
        %497 = vmatprep.subr.mxu0 0.0
        %498 = vmatpush1.msra.mxu0 %v433
        %499 = vmatprep.subr.mxu0 0.0
        %500 = vmatpush1.msra.mxu0 0.0
        %501 = vmatprep.subr.mxu0 0.0
        %502 = vmatpush1.msra.mxu0 0.0
        %503 = vmatprep.subr.mxu0 0.0
        %504 = vmatpush1.msra.mxu0 0.0
        %505 = vmatprep.subr.mxu0 0.0
        %506 = vmatpush1.msra.mxu0 0.0
        %507 = vmatprep.subr.mxu0 0.0
        %508 = vmatpush1.msra.mxu0 0.0
        %509 = vmatprep.subr.mxu0 0.0
        %510 = vmatpush1.msra.mxu0 0.0
        %511 = vmatprep.subr.mxu0 0.0
        %512 = vmatpush1.msra.mxu0 0.0
        %513 = vmatprep.subr.mxu0 0.0
        %514 = vmatpush1.msra.mxu0 0.0
        %515 = vmatprep.subr.mxu0 0.0
        %516 = vmatpush1.msra.mxu0 0.0
        %517 = vmatprep.subr.mxu0 0.0
        %518 = vmatpush1.msra.mxu0 0.0
        %519 = vmatprep.subr.mxu0 0.0
        %520 = vmatpush1.msra.mxu0 0.0
        %521 = vmatprep.subr.mxu0 0.0
        %522 = vmatpush1.msra.mxu0 0.0
        %523 = vmatprep.subr.mxu0 0.0
        %524 = vmatpush1.msra.mxu0 0.0
        %525 = vmatprep.subr.mxu0 0.0
        %526 = vmatpush1.msra.mxu0 0.0
        %527 = vmatprep.subr.mxu0 0.0
        %528 = vmatpush1.msra.mxu0 0.0
        %529 = vmatprep.subr.mxu0 0.0
        %530 = vmatpush1.msra.mxu0 0.0
        %531 = vmatprep.subr.mxu0 0.0
        %532 = vmatpush1.msra.mxu0 0.0
        %533 = vmatprep.subr.mxu0 0.0
        %534 = vmatpush1.msra.mxu0 0.0
        %535 = vmatprep.subr.mxu0 0.0
        %536 = vmatpush1.msra.mxu0 0.0
        %537 = vmatprep.subr.mxu0 0.0
        %538 = vmatpush1.msra.mxu0 0.0
        %539 = vmatprep.subr.mxu0 0.0
        %540 = vmatpush1.msra.mxu0 0.0
        %541 = vmatprep.subr.mxu0 0.0
        %542 = vmatpush1.msra.mxu0 0.0
        %543 = vmatprep.subr.mxu0 0.0
        %544 = vmatpush1.msra.mxu0 0.0
        %545 = vmatprep.subr.mxu0 0.0
        %546 = vmatpush1.msra.mxu0 0.0
        %547 = vmatprep.mubr.f32.mxu0 0.0
        %548 = vmatmul.mubr.f32.gmra.mrb[0].mxu0 %v436
        %v549 = vpop.f32.mrb[0].mxu0
        %v550 = vadd.f32 0.0, %v549
        %v551 = vpop.f32.mrb[0].mxu0
        %552 = vmatprep.mubr.f32.mxu0 0.0
        %553 = vmatmul.mubr.f32.gmra.mrb[0].mxu0 %v439
        %v554 = vpop.f32.mrb[0].mxu0
        %v555 = vadd.f32 0.0, %v554
        %v556 = vpop.f32.mrb[0].mxu0
        %557 = vmatprep.mubr.f32.mxu0 0.0
        %558 = vmatmul.mubr.f32.gmra.mrb[0].mxu0 %v442
        %v559 = vpop.f32.mrb[0].mxu0
        %v560 = vadd.f32 0.0, %v559
        %v561 = vpop.f32.mrb[0].mxu0
        %562 = vmatprep.mubr.f32.mxu0 0.0
        %563 = vmatmul.mubr.f32.gmra.mrb[0].mxu0 %v445
        %v564 = vpop.f32.mrb[0].mxu0
        %v565 = vadd.f32 0.0, %v564
        %v566 = vpop.f32.mrb[0].mxu0
        %567 = vmatprep.mubr.f32.mxu0 0.0
        %568 = vmatmul.mubr.f32.gmra.mrb[0].mxu0 %v448
        %v569 = vpop.f32.mrb[0].mxu0
        %v570 = vadd.f32 0.0, %v569
        %v571 = vpop.f32.mrb[0].mxu0
        %572 = vmatprep.mubr.f32.mxu0 0.0
        %573 = vmatmul.mubr.f32.gmra.mrb[0].mxu0 %v451
        %v574 = vpop.f32.mrb[0].mxu0
        %v575 = vadd.f32 0.0, %v574
        %v576 = vpop.f32.mrb[0].mxu0
        %577 = vmatprep.mubr.f32.mxu0 0.0
        %578 = vmatmul.mubr.f32.gmra.mrb[0].mxu0 %v454
        %v579 = vpop.f32.mrb[0].mxu0
        %v580 = vadd.f32 0.0, %v579
        %v581 = vpop.f32.mrb[0].mxu0
        %582 = vmatprep.mubr.f32.mxu0 0.0
        %583 = vmatmul.mubr.f32.gmra.mrb[0].mxu0 %v457
        %v584 = vpop.f32.mrb[0].mxu0
        %v585 = vadd.f32 0.0, %v584
        %v586 = vpop.f32.mrb[0].mxu0
        %587 = vmatprep.mubr.f32.mxu0 0.0
        %588 = vmatmul.mubr.f32.gmra.mrb[0].mxu0 %v460
        %v589 = vpop.f32.mrb[0].mxu0
        %v590 = vadd.f32 0.0, %v589
        %v591 = vpop.f32.mrb[0].mxu0
        %592 = vmatprep.mubr.f32.mxu0 0.0
        %593 = vmatmul.mubr.f32.gmra.mrb[0].mxu0 %v463
        %v594 = vpop.f32.mrb[0].mxu0
        %v595 = vadd.f32 0.0, %v594
        %v596 = vpop.f32.mrb[0].mxu0
        %597 = vmatprep.mubr.f32.mxu0 0.0
        %598 = vmatmul.mubr.f32.gmra.mrb[0].mxu0 %v466
        %v599 = vpop.f32.mrb[0].mxu0
        %v600 = vadd.f32 0.0, %v599
        %v601 = vpop.f32.mrb[0].mxu0
        %602 = vmatprep.mubr.f32.mxu0 0.0
        %603 = vmatmul.mubr.f32.gmra.mrb[0].mxu0 %v469
        %v604 = vpop.f32.mrb[0].mxu0
        %v605 = vadd.f32 0.0, %v604
        %v606 = vpop.f32.mrb[0].mxu0
        %607 = vmatprep.mubr.f32.mxu0 0.0
        %608 = vmatmul.mubr.f32.gmra.mrb[0].mxu0 %v472
        %v609 = vpop.f32.mrb[0].mxu0
        %v610 = vadd.f32 0.0, %v609
        %v611 = vpop.f32.mrb[0].mxu0
        %612 = vmatprep.mubr.f32.mxu0 0.0
        %613 = vmatmul.mubr.f32.gmra.mrb[0].mxu0 %v475
        %v614 = vpop.f32.mrb[0].mxu0
        %v615 = vadd.f32 0.0, %v614
        %v616 = vpop.f32.mrb[0].mxu0
        %617 = vmatprep.mubr.f32.mxu0 0.0
        %618 = vmatmul.mubr.f32.gmra.mrb[0].mxu0 %v478
        %v619 = vpop.f32.mrb[0].mxu0
        %v620 = vadd.f32 0.0, %v619
        %v621 = vpop.f32.mrb[0].mxu0
        %622 = vmatprep.mubr.f32.mxu0 0.0
        %623 = vmatmul.mubr.f32.gmra.mrb[0].mxu0 %v481
        %v624 = vpop.f32.mrb[0].mxu0
        %v625 = vadd.f32 0.0, %v624
        %v626 = vpop.f32.mrb[0].mxu0
        %627 = vdwg.mxu0
        %628 = vadd.xlane.f32.xlu0 %v550
        %v629 = vpop.xlane.xlu0 %628
        %630 = vadd.xlane.f32.xlu0 %v555
        %v631 = vpop.xlane.xlu0 %630
        %632 = vadd.xlane.f32.xlu0 %v560
        %v633 = vpop.xlane.xlu0 %632
        %634 = vadd.xlane.f32.xlu0 %v565
        %v635 = vpop.xlane.xlu0 %634
        %636 = vadd.xlane.f32.xlu0 %v570
        %v637 = vpop.xlane.xlu0 %636
        %638 = vadd.xlane.f32.xlu0 %v575
        %v639 = vpop.xlane.xlu0 %638
        %640 = vadd.xlane.f32.xlu0 %v580
        %v641 = vpop.xlane.xlu0 %640
        %642 = vadd.xlane.f32.xlu0 %v585
        %v643 = vpop.xlane.xlu0 %642
        %644 = vadd.xlane.f32.xlu0 %v590
        %v645 = vpop.xlane.xlu0 %644
        %646 = vadd.xlane.f32.xlu0 %v595
        %v647 = vpop.xlane.xlu0 %646
        %648 = vadd.xlane.f32.xlu0 %v600
        %v649 = vpop.xlane.xlu0 %648
        %650 = vadd.xlane.f32.xlu0 %v605
        %v651 = vpop.xlane.xlu0 %650
        %652 = vadd.xlane.f32.xlu0 %v610
        %v653 = vpop.xlane.xlu0 %652
        %654 = vadd.xlane.f32.xlu0 %v615
        %v655 = vpop.xlane.xlu0 %654
        %656 = vadd.xlane.f32.xlu0 %v620
        %v657 = vpop.xlane.xlu0 %656
        %658 = vadd.xlane.f32.xlu0 %v625
        %v659 = vpop.xlane.xlu0 %658
        %v660 = vrcp.pop 128.0
        %v661 = vmul.f32 %v629, %v660
        %v662 = vmul.f32 %v631, %v660
        %v663 = vmul.f32 %v633, %v660
        %v664 = vmul.f32 %v635, %v660
        %v665 = vmul.f32 %v637, %v660
        %v666 = vmul.f32 %v639, %v660
        %v667 = vmul.f32 %v641, %v660
        %v668 = vmul.f32 %v643, %v660
        %v669 = vmul.f32 %v645, %v660
        %v670 = vmul.f32 %v647, %v660
        %v671 = vmul.f32 %v649, %v660
        %v672 = vmul.f32 %v651, %v660
        %v673 = vmul.f32 %v653, %v660
        %v674 = vmul.f32 %v655, %v660
        %v675 = vmul.f32 %v657, %v660
        %v676 = vmul.f32 %v659, %v660
        %v677 = vsub.f32 %v550, %v661
        %v678 = vsub.f32 %v555, %v662
        %v679 = vsub.f32 %v560, %v663
        %v680 = vsub.f32 %v565, %v664
        %v681 = vsub.f32 %v570, %v665
        %v682 = vsub.f32 %v575, %v666
        %v683 = vsub.f32 %v580, %v667
        %v684 = vsub.f32 %v585, %v668
        %v685 = vsub.f32 %v590, %v669
        %v686 = vsub.f32 %v595, %v670
        %v687 = vsub.f32 %v600, %v671
        %v688 = vsub.f32 %v605, %v672
        %v689 = vsub.f32 %v610, %v673
        %v690 = vsub.f32 %v615, %v674
        %v691 = vsub.f32 %v620, %v675
        %v692 = vsub.f32 %v625, %v676
        %v693 = vmul.f32 %v677, %v677
        %v694 = vmul.f32 %v678, %v678
        %v695 = vmul.f32 %v679, %v679
        %v696 = vmul.f32 %v680, %v680
        %v697 = vmul.f32 %v681, %v681
        %v698 = vmul.f32 %v682, %v682
        %v699 = vmul.f32 %v683, %v683
        %v700 = vmul.f32 %v684, %v684
        %v701 = vmul.f32 %v685, %v685
        %v702 = vmul.f32 %v686, %v686
        %v703 = vmul.f32 %v687, %v687
        %v704 = vmul.f32 %v688, %v688
        %v705 = vmul.f32 %v689, %v689
        %v706 = vmul.f32 %v690, %v690
        %v707 = vmul.f32 %v691, %v691
        %v708 = vmul.f32 %v692, %v692
        %709 = vadd.xlane.f32.xlu0 %v693
        %v710 = vpop.xlane.xlu0 %709
        %711 = vadd.xlane.f32.xlu0 %v694
        %v712 = vpop.xlane.xlu0 %711
        %713 = vadd.xlane.f32.xlu0 %v695
        %v714 = vpop.xlane.xlu0 %713
        %715 = vadd.xlane.f32.xlu0 %v696
        %v716 = vpop.xlane.xlu0 %715
        %717 = vadd.xlane.f32.xlu0 %v697
        %v718 = vpop.xlane.xlu0 %717
        %719 = vadd.xlane.f32.xlu0 %v698
        %v720 = vpop.xlane.xlu0 %719
        %721 = vadd.xlane.f32.xlu0 %v699
        %v722 = vpop.xlane.xlu0 %721
        %723 = vadd.xlane.f32.xlu0 %v700
        %v724 = vpop.xlane.xlu0 %723
        %725 = vadd.xlane.f32.xlu0 %v701
        %v726 = vpop.xlane.xlu0 %725
        %727 = vadd.xlane.f32.xlu0 %v702
        %v728 = vpop.xlane.xlu0 %727
        %729 = vadd.xlane.f32.xlu0 %v703
        %v730 = vpop.xlane.xlu0 %729
        %731 = vadd.xlane.f32.xlu0 %v704
        %v732 = vpop.xlane.xlu0 %731
        %733 = vadd.xlane.f32.xlu0 %v705
        %v734 = vpop.xlane.xlu0 %733
        %735 = vadd.xlane.f32.xlu0 %v706
        %v736 = vpop.xlane.xlu0 %735
        %737 = vadd.xlane.f32.xlu0 %v707
        %v738 = vpop.xlane.xlu0 %737
        %739 = vadd.xlane.f32.xlu0 %v708
        %v740 = vpop.xlane.xlu0 %739
        %v741 = vmul.f32 %v710, %v660
        %v742 = vmul.f32 %v712, %v660
        %v743 = vmul.f32 %v714, %v660
        %v744 = vmul.f32 %v716, %v660
        %v745 = vmul.f32 %v718, %v660
        %v746 = vmul.f32 %v720, %v660
        %v747 = vmul.f32 %v722, %v660
        %v748 = vmul.f32 %v724, %v660
        %v749 = vmul.f32 %v726, %v660
        %v750 = vmul.f32 %v728, %v660
        %v751 = vmul.f32 %v730, %v660
        %v752 = vmul.f32 %v732, %v660
        %v753 = vmul.f32 %v734, %v660
        %v754 = vmul.f32 %v736, %v660
        %v755 = vmul.f32 %v738, %v660
        %v756 = vmul.f32 %v740, %v660
        %v757 = vadd.f32 %v741, 1e-07
        %v758 = vadd.f32 %v742, 1e-07
        %v759 = vadd.f32 %v743, 1e-07
        %v760 = vadd.f32 %v744, 1e-07
        %v761 = vadd.f32 %v745, 1e-07
        %v762 = vadd.f32 %v746, 1e-07
        %v763 = vadd.f32 %v747, 1e-07
        %v764 = vadd.f32 %v748, 1e-07
        %v765 = vadd.f32 %v749, 1e-07
        %v766 = vadd.f32 %v750, 1e-07
        %v767 = vadd.f32 %v751, 1e-07
        %v768 = vadd.f32 %v752, 1e-07
        %v769 = vadd.f32 %v753, 1e-07
        %v770 = vadd.f32 %v754, 1e-07
        %v771 = vadd.f32 %v755, 1e-07
        %v772 = vadd.f32 %v756, 1e-07
        %v773 = vrsqrt.pop %v757
        %v774 = vrsqrt.pop %v758
        %v775 = vrsqrt.pop %v759
        %v776 = vrsqrt.pop %v760
        %v777 = vrsqrt.pop %v761
        %v778 = vrsqrt.pop %v762
        %v779 = vrsqrt.pop %v763
        %v780 = vrsqrt.pop %v764
        %v781 = vrsqrt.pop %v765
        %v782 = vrsqrt.pop %v766
        %v783 = vrsqrt.pop %v767
        %v784 = vrsqrt.pop %v768
        %v785 = vrsqrt.pop %v769
        %v786 = vrsqrt.pop %v770
        %v787 = vrsqrt.pop %v771
        %v788 = vrsqrt.pop %v772
        %v789 = vmul.f32 %v677, %v773
        %v790 = vmul.f32 %v678, %v774
        %v791 = vmul.f32 %v679, %v775
        %v792 = vmul.f32 %v680, %v776
        %v793 = vmul.f32 %v681, %v777
        %v794 = vmul.f32 %v682, %v778
        %v795 = vmul.f32 %v683, %v779
        %v796 = vmul.f32 %v684, %v780
        %v797 = vmul.f32 %v685, %v781
        %v798 = vmul.f32 %v686, %v782
        %v799 = vmul.f32 %v687, %v783
        %v800 = vmul.f32 %v688, %v784
        %v801 = vmul.f32 %v689, %v785
        %v802 = vmul.f32 %v690, %v786
        %v803 = vmul.f32 %v691, %v787
        %v804 = vmul.f32 %v692, %v788
        %v805 = vld [vmem:[%s5] sm:$0x1]
        %v807 = vlaneseq
        %v808 = vshrl.u32 %v807, 7
        %v809 = vsub.s32 0, %v808
        %v810 = vrot.slane %v805, %v809
        %v812 = vmul.f32 %v789, %v810
        %v813 = vmul.f32 %v790, %v810
        %v814 = vmul.f32 %v791, %v810
        %v815 = vmul.f32 %v792, %v810
        %v816 = vmul.f32 %v793, %v810
        %v817 = vmul.f32 %v794, %v810
        %v818 = vmul.f32 %v795, %v810
        %v819 = vmul.f32 %v796, %v810
        %v820 = vmul.f32 %v797, %v810
        %v821 = vmul.f32 %v798, %v810
        %v822 = vmul.f32 %v799, %v810
        %v823 = vmul.f32 %v800, %v810
        %v824 = vmul.f32 %v801, %v810
        %v825 = vmul.f32 %v802, %v810
        %v826 = vmul.f32 %v803, %v810
        %v827 = vmul.f32 %v804, %v810
        %v828 = vld [vmem:[%s6] sm:$0x1]
        %v830 = vlaneseq
        %v831 = vshrl.u32 %v830, 7
        %v832 = vsub.s32 0, %v831
        %v833 = vrot.slane %v828, %v832
        %v835 = vadd.f32 %v812, %v833
        %v836 = vadd.f32 %v813, %v833
        %v837 = vadd.f32 %v814, %v833
        %v838 = vadd.f32 %v815, %v833
        %v839 = vadd.f32 %v816, %v833
        %v840 = vadd.f32 %v817, %v833
        %v841 = vadd.f32 %v818, %v833
        %v842 = vadd.f32 %v819, %v833
        %v843 = vadd.f32 %v820, %v833
        %v844 = vadd.f32 %v821, %v833
        %v845 = vadd.f32 %v822, %v833
        %v846 = vadd.f32 %v823, %v833
        %v847 = vadd.f32 %v824, %v833
        %v848 = vadd.f32 %v825, %v833
        %v849 = vadd.f32 %v826, %v833
        %v850 = vadd.f32 %v827, %v833
        %v851 = vld [vmem:[%s343] sm:$0xff]
        %v852 = vld [vmem:[%s343 + $0x8] sm:$0xff]
        %v853 = vld [vmem:[%s343 + $0x10] sm:$0xff]
        %v854 = vld [vmem:[%s343 + $0x18] sm:$0xff]
        %v855 = vld [vmem:[%s343 + $0x20] sm:$0xff]
        %v856 = vld [vmem:[%s343 + $0x28] sm:$0xff]
        %v857 = vld [vmem:[%s343 + $0x30] sm:$0xff]
        %v858 = vld [vmem:[%s343 + $0x38] sm:$0xff]
        %v859 = vld [vmem:[%s343 + $0x40] sm:$0xff]
        %v860 = vld [vmem:[%s343 + $0x48] sm:$0xff]
        %v861 = vld [vmem:[%s343 + $0x50] sm:$0xff]
        %v862 = vld [vmem:[%s343 + $0x58] sm:$0xff]
        %v863 = vld [vmem:[%s343 + $0x60] sm:$0xff]
        %v864 = vld [vmem:[%s343 + $0x68] sm:$0xff]
        %v865 = vld [vmem:[%s343 + $0x70] sm:$0xff]
        %v866 = vld [vmem:[%s343 + $0x78] sm:$0xff]
        %868 = vset.pattern.permute.xlu0 0
        %869 = vperm.xlu0 %868, %v851
        %v870 = vpop.permute.xlu0 %869
        %873 = vset.pattern.permute.xlu0 0
        %874 = vperm.xlu0 %873, %v852
        %v875 = vpop.permute.xlu0 %874
        %878 = vset.pattern.permute.xlu0 0
        %879 = vperm.xlu0 %878, %v853
        %v880 = vpop.permute.xlu0 %879
        %883 = vset.pattern.permute.xlu0 0
        %884 = vperm.xlu0 %883, %v854
        %v885 = vpop.permute.xlu0 %884
        %888 = vset.pattern.permute.xlu0 0
        %889 = vperm.xlu0 %888, %v855
        %v890 = vpop.permute.xlu0 %889
        %893 = vset.pattern.permute.xlu0 0
        %894 = vperm.xlu0 %893, %v856
        %v895 = vpop.permute.xlu0 %894
        %898 = vset.pattern.permute.xlu0 0
        %899 = vperm.xlu0 %898, %v857
        %v900 = vpop.permute.xlu0 %899
        %903 = vset.pattern.permute.xlu0 0
        %904 = vperm.xlu0 %903, %v858
        %v905 = vpop.permute.xlu0 %904
        %908 = vset.pattern.permute.xlu0 0
        %909 = vperm.xlu0 %908, %v859
        %v910 = vpop.permute.xlu0 %909
        %913 = vset.pattern.permute.xlu0 0
        %914 = vperm.xlu0 %913, %v860
        %v915 = vpop.permute.xlu0 %914
        %918 = vset.pattern.permute.xlu0 0
        %919 = vperm.xlu0 %918, %v861
        %v920 = vpop.permute.xlu0 %919
        %923 = vset.pattern.permute.xlu0 0
        %924 = vperm.xlu0 %923, %v862
        %v925 = vpop.permute.xlu0 %924
        %928 = vset.pattern.permute.xlu0 0
        %929 = vperm.xlu0 %928, %v863
        %v930 = vpop.permute.xlu0 %929
        %933 = vset.pattern.permute.xlu0 0
        %934 = vperm.xlu0 %933, %v864
        %v935 = vpop.permute.xlu0 %934
        %938 = vset.pattern.permute.xlu0 0
        %939 = vperm.xlu0 %938, %v865
        %v940 = vpop.permute.xlu0 %939
        %943 = vset.pattern.permute.xlu0 0
        %944 = vperm.xlu0 %943, %v866
        %v945 = vpop.permute.xlu0 %944
        %v947 = vmul.f32 %v835, %v870
        %v948 = vmul.f32 %v836, %v875
        %v949 = vmul.f32 %v837, %v880
        %v950 = vmul.f32 %v838, %v885
        %v951 = vmul.f32 %v839, %v890
        %v952 = vmul.f32 %v840, %v895
        %v953 = vmul.f32 %v841, %v900
        %v954 = vmul.f32 %v842, %v905
        %v955 = vmul.f32 %v843, %v910
        %v956 = vmul.f32 %v844, %v915
        %v957 = vmul.f32 %v845, %v920
        %v958 = vmul.f32 %v846, %v925
        %v959 = vmul.f32 %v847, %v930
        %v960 = vmul.f32 %v848, %v935
        %v961 = vmul.f32 %v849, %v940
        %v962 = vmul.f32 %v850, %v945
        %963 = vst [vmem:[%s320] sm:$0xff] %v947
        %964 = vst [vmem:[%s320 + $0x8] sm:$0xff] %v948
        %965 = vst [vmem:[%s320 + $0x10] sm:$0xff] %v949
        %966 = vst [vmem:[%s320 + $0x18] sm:$0xff] %v950
        %967 = vst [vmem:[%s320 + $0x20] sm:$0xff] %v951
        %968 = vst [vmem:[%s320 + $0x28] sm:$0xff] %v952
        %969 = vst [vmem:[%s320 + $0x30] sm:$0xff] %v953
        %970 = vst [vmem:[%s320 + $0x38] sm:$0xff] %v954
        %971 = vst [vmem:[%s320 + $0x40] sm:$0xff] %v955
        %972 = vst [vmem:[%s320 + $0x48] sm:$0xff] %v956
        %973 = vst [vmem:[%s320 + $0x50] sm:$0xff] %v957
        %974 = vst [vmem:[%s320 + $0x58] sm:$0xff] %v958
        %975 = vst [vmem:[%s320 + $0x60] sm:$0xff] %v959
        %976 = vst [vmem:[%s320 + $0x68] sm:$0xff] %v960
        %977 = vst [vmem:[%s320 + $0x70] sm:$0xff] %v961
        %978 = vst [vmem:[%s320 + $0x78] sm:$0xff] %v962
        %s979 = sand.u32 %s196, 1
        %s980 = scalar_lea.sflag [#allocation3], %s979
        %s981 = sand.u32 %s196, 1
        %s982 = smul.addr %s981, 128
        %s983 = scalar_lea.vmem [#allocation2], %s982
        // Predicated region
        $region49: #{tpu_custom_call.1} parent=47 // pred_check
          %p984 = pneg %p206
        $region50: #{tpu_custom_call.1} parent=47 // pred_check_branch
          %986 = sbr.rel (%p984) target = $region52
        $region51: #{tpu_custom_call.1} parent=47 // pred_region
          %s987 = smul.u32 16, %s21
          %s989 = ssub.s32 2048, 2048
          %990 = vsyncadd %s980, %s989
          %s991 = smul.addr %s987, 128
          %s992 = scalar_lea.hbm %s7, %s991
          %s993 = sshll.u32 %s983, 4
          %s994 = int_to_ptr.vmem [resolvable:$true] %s993
          %999 = dma.vmem_to_hbm [thread:$0]  %s994, 2048, %s992, %s980, 128, 128, 8
        $region52: #{tpu_custom_call.1} parent=47 // pred_fallthru
          _
      $region48: #{tpu_custom_call.1} parent=5 // pred_fallthru
        _
      %p1000 = scmp.le.s32.totalorder 2, %s16
      // Predicated region
      $region53: #{tpu_custom_call.1} parent=5 // pred_check
        %p1001 = pneg %p1000
      $region54: #{tpu_custom_call.1} parent=5 // pred_check_branch
        %1003 = sbr.rel (%p1001) target = $region56
      $region55: #{tpu_custom_call.1} parent=5 // pred_region
        %s1004 = ssub.s32 %s16, 2
        // Predicated region
        $region57: #{tpu_custom_call.1} parent=55 // pred_check
          %p1005 = pneg %p212
        $region58: #{tpu_custom_call.1} parent=55 // pred_check_branch
          %1007 = sbr.rel (%p1005) target = $region60
        $region59: #{tpu_custom_call.1} parent=55 // pred_region
          %s1008 = sand.u32 %s197, 1
          %s1009 = scalar_lea.sflag [#allocation3], %s1008
          %s1010 = sand.u32 %s197, 1
          %s1011 = smul.addr %s1010, 128
          %s1012 = scalar_lea.vmem [#allocation2], %s1011
          %1013 = dma.done %s1009, 2048
        $region60: #{tpu_custom_call.1} parent=55 // pred_fallthru
          _
      $region56: #{tpu_custom_call.1} parent=5 // pred_fallthru
        _
    $region6: #{tpu_custom_call.1} parent=1 // loop_footer
      %s20 = sadd.s32 1, %s16
    $region7: #{tpu_custom_call.1} parent=1 // loop_footer_branch
      %15 = sbr.rel target = $region3
    $region8: #{tpu_custom_call.1} parent=1 // loop_exit
      _
    %1014 = vsyncpa [#allocation3], 1
    %s1015 = scalar_lea.sflag [#allocation3], 1
    %1016 = vsyncpa %s1015, 1

</llo_original>
